<compile_context>
chip_gen: v5e
topology: v5e:2x2
jax: 0.10.0
libtpu: 0.0.40
codegen_flags: <defaults>
</compile_context>

<pallas_src>
import functools
import math

import jax
import jax.numpy as jnp
from jax import lax
from jax.experimental import pallas as pl
from jax.experimental.pallas import tpu as pltpu


def mha_kernel(xq_ref, xk_ref, xv_ref, wq_ref, wk_ref, wv_ref, wfc_ref,
               out_ref, attn_ref, *, n_head, d_head, scale, mxu_dtype):
    """One grid step = one (batch b, q-tile) pair; all heads fused.

    xq_ref            : (1, TQ, D)    q-tile of batch b
    xk_ref / xv_ref   : (1, Lk, D)    full key/value sequence of batch b
    wq/wk/wv_ref      : (D, H*D)      pre-transposed projection weights
    wfc_ref           : (H*D, D)      pre-transposed output projection
    out_ref           : (1, TQ, D)
    attn_ref          : (1, TQ, Lk)   mean over heads of pre-softmax logits
    """
    def mx(x):
        return x if x.dtype == mxu_dtype else x.astype(mxu_dtype)

    xq = xq_ref[0]                      # (TQ, D)
    xk = xk_ref[0]                      # (Lk, D)
    xv = xv_ref[0]                      # (Lk, D)

    # Fused projections: one lane-dense matmul each (N = H*D).
    qp = jnp.dot(mx(xq), wq_ref[...], preferred_element_type=jnp.float32)   # (TQ, H*D)
    kp = jnp.dot(mx(xk), wk_ref[...], preferred_element_type=jnp.float32)   # (Lk, H*D)
    vp = jnp.dot(mx(xv), wv_ref[...], preferred_element_type=jnp.float32)   # (Lk, H*D)

    o_heads = []
    logits_sum = None
    for h in range(n_head):             # static unroll at trace time (no grid axis)
        sl = slice(h * d_head, (h + 1) * d_head)
        q_h = qp[:, sl] * scale         # (TQ, D)
        k_h = kp[:, sl]                 # (Lk, D)
        v_h = vp[:, sl]                 # (Lk, D)

        # Contract on the last dims of q and k -> no explicit k.T materialized.
        logits = lax.dot_general(mx(q_h), mx(k_h), (((1,), (1,)), ((), ())),
                                 preferred_element_type=jnp.float32)        # (TQ, Lk)
        logits_sum = logits if logits_sum is None else logits_sum + logits

        # softmax over the key axis (f32; reciprocal on the EUP slot)
        m = jnp.max(logits, axis=-1, keepdims=True)
        e = jnp.exp(logits - m)
        inv = pl.reciprocal(jnp.sum(e, axis=-1, keepdims=True), approx=True)
        p = e * inv

        o_heads.append(jnp.dot(mx(p), mx(v_h),
                               preferred_element_type=jnp.float32))         # (TQ, D)

    # Concatenate head outputs -> one lane-dense (TQ, H*D) @ (H*D, D) matmul.
    o_cat = jnp.concatenate(o_heads, axis=-1)                               # (TQ, H*D)
    out = jnp.dot(mx(o_cat), wfc_ref[...], preferred_element_type=jnp.float32)

    out_ref[0] = out.astype(out_ref.dtype)
    attn_ref[0] = (logits_sum * (1.0 / n_head)).astype(attn_ref.dtype)


def my_multihead_attention(q, k, v, w_qs, w_ks, w_vs, w_fc, n_head,
                           *, mxu_dtype=jnp.float32):
    """q, k, v: (seq, batch, d_model); weights in torch nn.Linear layout.

    Returns (out (seq, batch, d_model), attn_logits_mean (batch, 1, Lq, Lk)).
    Set mxu_dtype=jnp.bfloat16 to feed the MXU bf16 inputs on v6e/v7x.
    """
    L, B, D = q.shape
    xq = jnp.transpose(q, (1, 0, 2))    # (B, Lq, D)
    xk = jnp.transpose(k, (1, 0, 2))    # (B, Lk, D)
    xv = jnp.transpose(v, (1, 0, 2))    # (B, Lk, D)
    Lq, Lk = xq.shape[1], xk.shape[1]
    HD = n_head * D

    # Pre-transpose weights once at trace time -> kernel does x @ W (no .T).
    wq_t = jnp.transpose(w_qs)          # (D, H*D)
    wk_t = jnp.transpose(w_ks)          # (D, H*D)
    wv_t = jnp.transpose(w_vs)          # (D, H*D)
    wfc_t = jnp.transpose(w_fc)         # (H*D, D)

    if mxu_dtype != jnp.float32:
        xq = xq.astype(mxu_dtype)
        xk = xk.astype(mxu_dtype)
        xv = xv.astype(mxu_dtype)
        wq_t = wq_t.astype(mxu_dtype)
        wk_t = wk_t.astype(mxu_dtype)
        wv_t = wv_t.astype(mxu_dtype)
        wfc_t = wfc_t.astype(mxu_dtype)

    # Tile Lq so the (TQ, Lk) logits block stays bounded (v7x has 64 MiB VMEM);
    # at small Lq this collapses to a single tile.
    TQ = Lq if Lq <= 128 else 128
    grid = (B, pl.cdiv(Lq, TQ))

    kernel = functools.partial(mha_kernel, n_head=n_head, d_head=D,
                               scale=1.0 / math.sqrt(D), mxu_dtype=mxu_dtype)

    out, attn = pl.pallas_call(
        kernel,
        out_shape=(
            jax.ShapeDtypeStruct((B, Lq, D), jnp.float32),
            jax.ShapeDtypeStruct((B, Lq, Lk), jnp.float32),
        ),
        grid_spec=pltpu.PrefetchScalarGridSpec(
            num_scalar_prefetch=0,
            grid=grid,                                   # (B, Lq-tiles), no head axis
            in_specs=[
                pl.BlockSpec((1, TQ, D), lambda b, qi: (b, qi, 0)),
                pl.BlockSpec((1, Lk, D), lambda b, qi: (b, 0, 0)),
                pl.BlockSpec((1, Lk, D), lambda b, qi: (b, 0, 0)),
                # Constant block index -> weights DMA'd once, stay VMEM-resident.
                pl.BlockSpec((D, HD), lambda b, qi: (0, 0)),
                pl.BlockSpec((D, HD), lambda b, qi: (0, 0)),
                pl.BlockSpec((D, HD), lambda b, qi: (0, 0)),
                pl.BlockSpec((HD, D), lambda b, qi: (0, 0)),
            ],
            out_specs=[
                pl.BlockSpec((1, TQ, D), lambda b, qi: (b, qi, 0)),
                pl.BlockSpec((1, TQ, Lk), lambda b, qi: (b, qi, 0)),
            ],
        ),
        compiler_params=pltpu.CompilerParams(
            dimension_semantics=("parallel", "parallel")),
    )(xq, xk, xv, wq_t, wk_t, wv_t, wfc_t)

    out_seq_first = jnp.transpose(out, (1, 0, 2))        # (Lq, B, D)
    attn_mean = attn[:, None, :, :]                      # (B, 1, Lq, Lk)
    return out_seq_first, attn_mean


def reference(q, k, v, w_qs, w_ks, w_vs, w_fc, n_head):
    """Pure-JAX mirror of the PyTorch forward (mask=None, eval mode)."""
    L, B, D = q.shape
    xq = jnp.transpose(q, (1, 0, 2))
    xk = jnp.transpose(k, (1, 0, 2))
    xv = jnp.transpose(v, (1, 0, 2))
    qp = (xq @ w_qs.T).reshape(B, L, n_head, D).transpose(0, 2, 1, 3)
    kp = (xk @ w_ks.T).reshape(B, L, n_head, D).transpose(0, 2, 1, 3)
    vp = (xv @ w_vs.T).reshape(B, L, n_head, D).transpose(0, 2, 1, 3)
    logits = jnp.einsum('bhqd,bhkd->bhqk', qp / (D ** 0.5), kp)
    attn = jax.nn.softmax(logits, axis=-1)
    o = jnp.einsum('bhqk,bhkd->bhqd', attn, vp)
    o = o.transpose(0, 2, 1, 3).reshape(B, L, n_head * D)
    out = o @ w_fc.T
    out = jnp.transpose(out, (1, 0, 2))
    attn_mean = jnp.mean(logits, axis=1, keepdims=True)
    return out, attn_mean


if __name__ == "__main__":
    # Small shapes consistent with the module: seq=8, batch=2, d_model=32, heads=4.
    L, B, D, H = 8, 2, 32, 4

    key = jax.random.PRNGKey(0)
    keys = jax.random.split(key, 7)
    q = jax.random.normal(keys[0], (L, B, D), jnp.float32)
    k = jax.random.normal(keys[1], (L, B, D), jnp.float32)
    v = jax.random.normal(keys[2], (L, B, D), jnp.float32)

    # Deterministic parameter init mimicking nn.Linear (uniform +/- 1/sqrt(fan_in)).
    b1 = 1.0 / math.sqrt(D)
    w_qs = jax.random.uniform(keys[3], (H * D, D), jnp.float32, -b1, b1)
    w_ks = jax.random.uniform(keys[4], (H * D, D), jnp.float32, -b1, b1)
    w_vs = jax.random.uniform(keys[5], (H * D, D), jnp.float32, -b1, b1)
    b2 = 1.0 / math.sqrt(H * D)
    w_fc = jax.random.uniform(keys[6], (D, H * D), jnp.float32, -b2, b2)

    out, attn = my_multihead_attention(q, k, v, w_qs, w_ks, w_vs, w_fc, H)
    (out, attn) = jax.block_until_ready((out, attn))

    ref_out, ref_attn = reference(q, k, v, w_qs, w_ks, w_vs, w_fc, H)
    assert out.shape == (L, B, D) and attn.shape == (B, 1, L, L)
    # Pre-softmax logit mean does not go through the approx reciprocal -> tight check.
    assert jnp.allclose(attn, ref_attn, atol=1e-4, rtol=1e-4)
    # Output path uses pl.reciprocal(approx=True) for the softmax denominator,
    # so allow a slightly wider (still small) tolerance.
    assert jnp.allclose(out, ref_out, atol=2e-3, rtol=2e-3)

    print("KERNEL_OK")
</pallas_src>

<mosaic_0001>
module attributes {stable_mosaic.version = 11 : i64} {
  func.func @mha_kernel(%arg0: i32, %arg1: i32, %arg2: memref<1x8x32xf32, #tpu.memory_space<vmem>>, %arg3: memref<1x8x32xf32, #tpu.memory_space<vmem>>, %arg4: memref<1x8x32xf32, #tpu.memory_space<vmem>>, %arg5: memref<32x128xf32, #tpu.memory_space<vmem>>, %arg6: memref<32x128xf32, #tpu.memory_space<vmem>>, %arg7: memref<32x128xf32, #tpu.memory_space<vmem>>, %arg8: memref<128x32xf32, #tpu.memory_space<vmem>>, %arg9: memref<1x8x32xf32, #tpu.memory_space<vmem>>, %arg10: memref<1x8x8xf32, #tpu.memory_space<vmem>>) attributes {dimension_semantics = [#tpu.dimension_semantics<parallel>, #tpu.dimension_semantics<parallel>], iteration_bounds = array<i64: 2, 1>, scalar_prefetch = 0 : i64, scratch_operands = 0 : i64, tpu.core_type = #tpu.core_type<tc>, window_params = [{transform_indices = @transform_0, window_bounds = array<i64: 1, 8, 32>}, {transform_indices = @transform_1, window_bounds = array<i64: 1, 8, 32>}, {transform_indices = @transform_2, window_bounds = array<i64: 1, 8, 32>}, {pipeline_mode = #tpu.pipeline_mode<synchronous>, transform_indices = @transform_3, window_bounds = array<i64: 32, 128>}, {pipeline_mode = #tpu.pipeline_mode<synchronous>, transform_indices = @transform_4, window_bounds = array<i64: 32, 128>}, {pipeline_mode = #tpu.pipeline_mode<synchronous>, transform_indices = @transform_5, window_bounds = array<i64: 32, 128>}, {pipeline_mode = #tpu.pipeline_mode<synchronous>, transform_indices = @transform_6, window_bounds = array<i64: 128, 32>}, {transform_indices = @transform_7, window_bounds = array<i64: 1, 8, 32>}, {transform_indices = @transform_8, window_bounds = array<i64: 1, 8, 8>}]} {
    %c0 = arith.constant 0 : index
    %c0_0 = arith.constant 0 : index
    %c0_1 = arith.constant 0 : index
    %0 = vector.load %arg2[%c0, %c0_0, %c0_1] : memref<1x8x32xf32, #tpu.memory_space<vmem>>, vector<1x8x32xf32>
    %1 = vector.shape_cast %0 : vector<1x8x32xf32> to vector<8x32xf32>
    %c0_2 = arith.constant 0 : index
    %c0_3 = arith.constant 0 : index
    %c0_4 = arith.constant 0 : index
    %2 = vector.load %arg3[%c0_2, %c0_3, %c0_4] : memref<1x8x32xf32, #tpu.memory_space<vmem>>, vector<1x8x32xf32>
    %3 = vector.shape_cast %2 : vector<1x8x32xf32> to vector<8x32xf32>
    %c0_5 = arith.constant 0 : index
    %c0_6 = arith.constant 0 : index
    %c0_7 = arith.constant 0 : index
    %4 = vector.load %arg4[%c0_5, %c0_6, %c0_7] : memref<1x8x32xf32, #tpu.memory_space<vmem>>, vector<1x8x32xf32>
    %5 = vector.shape_cast %4 : vector<1x8x32xf32> to vector<8x32xf32>
    %c0_8 = arith.constant 0 : index
    %c0_9 = arith.constant 0 : index
    %6 = vector.load %arg5[%c0_8, %c0_9] : memref<32x128xf32, #tpu.memory_space<vmem>>, vector<32x128xf32>
    %cst = arith.constant dense<0.000000e+00> : vector<8x128xf32>
    %7 = tpu.matmul %1, %6, %cst {dimension_numbers = #tpu.dot_dimension_numbers<[1], [0], [0], [1], [0, 0, 1, 1], [], []>} : vector<8x32xf32>, vector<32x128xf32>, vector<8x128xf32> -> vector<8x128xf32>
    %c0_10 = arith.constant 0 : index
    %c0_11 = arith.constant 0 : index
    %8 = vector.load %arg6[%c0_10, %c0_11] : memref<32x128xf32, #tpu.memory_space<vmem>>, vector<32x128xf32>
    %cst_12 = arith.constant dense<0.000000e+00> : vector<8x128xf32>
    %9 = tpu.matmul %3, %8, %cst_12 {dimension_numbers = #tpu.dot_dimension_numbers<[1], [0], [0], [1], [0, 0, 1, 1], [], []>} : vector<8x32xf32>, vector<32x128xf32>, vector<8x128xf32> -> vector<8x128xf32>
    %c0_13 = arith.constant 0 : index
    %c0_14 = arith.constant 0 : index
    %10 = vector.load %arg7[%c0_13, %c0_14] : memref<32x128xf32, #tpu.memory_space<vmem>>, vector<32x128xf32>
    %cst_15 = arith.constant dense<0.000000e+00> : vector<8x128xf32>
    %11 = tpu.matmul %5, %10, %cst_15 {dimension_numbers = #tpu.dot_dimension_numbers<[1], [0], [0], [1], [0, 0, 1, 1], [], []>} : vector<8x32xf32>, vector<32x128xf32>, vector<8x128xf32> -> vector<8x128xf32>
    %12 = vector.extract_strided_slice %7 {offsets = [0, 0], sizes = [8, 32], strides = [1, 1]} : vector<8x128xf32> to vector<8x32xf32>
    %cst_16 = arith.constant 0.176776692 : f32
    %13 = vector.broadcast %cst_16 : f32 to vector<8x32xf32>
    %14 = arith.mulf %12, %13 : vector<8x32xf32>
    %15 = vector.extract_strided_slice %9 {offsets = [0, 0], sizes = [8, 32], strides = [1, 1]} : vector<8x128xf32> to vector<8x32xf32>
    %16 = vector.extract_strided_slice %11 {offsets = [0, 0], sizes = [8, 32], strides = [1, 1]} : vector<8x128xf32> to vector<8x32xf32>
    %cst_17 = arith.constant dense<0.000000e+00> : vector<8x8xf32>
    %17 = tpu.matmul %14, %15, %cst_17 {dimension_numbers = #tpu.dot_dimension_numbers<[1], [1], [0], [0], [0, 0, 1, 0], [], []>} : vector<8x32xf32>, vector<8x32xf32>, vector<8x8xf32> -> vector<8x8xf32>
    %cst_18 = arith.constant dense<0xFF800000> : vector<8xf32>
    %18 = vector.multi_reduction <maximumf>, %17, %cst_18 [1] : vector<8x8xf32> to vector<8xf32>
    %19 = vector.shape_cast %18 : vector<8xf32> to vector<8x1xf32>
    %20 = vector.broadcast %19 : vector<8x1xf32> to vector<8x8xf32>
    %21 = arith.subf %17, %20 : vector<8x8xf32>
    %22 = math.exp %21 : vector<8x8xf32>
    %cst_19 = arith.constant dense<0.000000e+00> : vector<8xf32>
    %23 = vector.multi_reduction <add>, %22, %cst_19 [1] : vector<8x8xf32> to vector<8xf32>
    %24 = vector.shape_cast %23 : vector<8xf32> to vector<8x1xf32>
    %25 = tpu.reciprocal %24 {approx = true} : vector<8x1xf32> -> vector<8x1xf32>
    %26 = vector.broadcast %25 : vector<8x1xf32> to vector<8x8xf32>
    %27 = arith.mulf %22, %26 : vector<8x8xf32>
    %cst_20 = arith.constant dense<0.000000e+00> : vector<8x32xf32>
    %28 = tpu.matmul %27, %16, %cst_20 {dimension_numbers = #tpu.dot_dimension_numbers<[1], [0], [0], [1], [0, 0, 1, 1], [], []>} : vector<8x8xf32>, vector<8x32xf32>, vector<8x32xf32> -> vector<8x32xf32>
    %29 = vector.extract_strided_slice %7 {offsets = [0, 32], sizes = [8, 32], strides = [1, 1]} : vector<8x128xf32> to vector<8x32xf32>
    %cst_21 = arith.constant 0.176776692 : f32
    %30 = vector.broadcast %cst_21 : f32 to vector<8x32xf32>
    %31 = arith.mulf %29, %30 : vector<8x32xf32>
    %32 = vector.extract_strided_slice %9 {offsets = [0, 32], sizes = [8, 32], strides = [1, 1]} : vector<8x128xf32> to vector<8x32xf32>
    %33 = vector.extract_strided_slice %11 {offsets = [0, 32], sizes = [8, 32], strides = [1, 1]} : vector<8x128xf32> to vector<8x32xf32>
    %cst_22 = arith.constant dense<0.000000e+00> : vector<8x8xf32>
    %34 = tpu.matmul %31, %32, %cst_22 {dimension_numbers = #tpu.dot_dimension_numbers<[1], [1], [0], [0], [0, 0, 1, 0], [], []>} : vector<8x32xf32>, vector<8x32xf32>, vector<8x8xf32> -> vector<8x8xf32>
    %35 = arith.addf %17, %34 : vector<8x8xf32>
    %cst_23 = arith.constant dense<0xFF800000> : vector<8xf32>
    %36 = vector.multi_reduction <maximumf>, %34, %cst_23 [1] : vector<8x8xf32> to vector<8xf32>
    %37 = vector.shape_cast %36 : vector<8xf32> to vector<8x1xf32>
    %38 = vector.broadcast %37 : vector<8x1xf32> to vector<8x8xf32>
    %39 = arith.subf %34, %38 : vector<8x8xf32>
    %40 = math.exp %39 : vector<8x8xf32>
    %cst_24 = arith.constant dense<0.000000e+00> : vector<8xf32>
    %41 = vector.multi_reduction <add>, %40, %cst_24 [1] : vector<8x8xf32> to vector<8xf32>
    %42 = vector.shape_cast %41 : vector<8xf32> to vector<8x1xf32>
    %43 = tpu.reciprocal %42 {approx = true} : vector<8x1xf32> -> vector<8x1xf32>
    %44 = vector.broadcast %43 : vector<8x1xf32> to vector<8x8xf32>
    %45 = arith.mulf %40, %44 : vector<8x8xf32>
    %cst_25 = arith.constant dense<0.000000e+00> : vector<8x32xf32>
    %46 = tpu.matmul %45, %33, %cst_25 {dimension_numbers = #tpu.dot_dimension_numbers<[1], [0], [0], [1], [0, 0, 1, 1], [], []>} : vector<8x8xf32>, vector<8x32xf32>, vector<8x32xf32> -> vector<8x32xf32>
    %47 = vector.extract_strided_slice %7 {offsets = [0, 64], sizes = [8, 32], strides = [1, 1]} : vector<8x128xf32> to vector<8x32xf32>
    %cst_26 = arith.constant 0.176776692 : f32
    %48 = vector.broadcast %cst_26 : f32 to vector<8x32xf32>
    %49 = arith.mulf %47, %48 : vector<8x32xf32>
    %50 = vector.extract_strided_slice %9 {offsets = [0, 64], sizes = [8, 32], strides = [1, 1]} : vector<8x128xf32> to vector<8x32xf32>
    %51 = vector.extract_strided_slice %11 {offsets = [0, 64], sizes = [8, 32], strides = [1, 1]} : vector<8x128xf32> to vector<8x32xf32>
    %cst_27 = arith.constant dense<0.000000e+00> : vector<8x8xf32>
    %52 = tpu.matmul %49, %50, %cst_27 {dimension_numbers = #tpu.dot_dimension_numbers<[1], [1], [0], [0], [0, 0, 1, 0], [], []>} : vector<8x32xf32>, vector<8x32xf32>, vector<8x8xf32> -> vector<8x8xf32>
    %53 = arith.addf %35, %52 : vector<8x8xf32>
    %cst_28 = arith.constant dense<0xFF800000> : vector<8xf32>
    %54 = vector.multi_reduction <maximumf>, %52, %cst_28 [1] : vector<8x8xf32> to vector<8xf32>
    %55 = vector.shape_cast %54 : vector<8xf32> to vector<8x1xf32>
    %56 = vector.broadcast %55 : vector<8x1xf32> to vector<8x8xf32>
    %57 = arith.subf %52, %56 : vector<8x8xf32>
    %58 = math.exp %57 : vector<8x8xf32>
    %cst_29 = arith.constant dense<0.000000e+00> : vector<8xf32>
    %59 = vector.multi_reduction <add>, %58, %cst_29 [1] : vector<8x8xf32> to vector<8xf32>
    %60 = vector.shape_cast %59 : vector<8xf32> to vector<8x1xf32>
    %61 = tpu.reciprocal %60 {approx = true} : vector<8x1xf32> -> vector<8x1xf32>
    %62 = vector.broadcast %61 : vector<8x1xf32> to vector<8x8xf32>
    %63 = arith.mulf %58, %62 : vector<8x8xf32>
    %cst_30 = arith.constant dense<0.000000e+00> : vector<8x32xf32>
    %64 = tpu.matmul %63, %51, %cst_30 {dimension_numbers = #tpu.dot_dimension_numbers<[1], [0], [0], [1], [0, 0, 1, 1], [], []>} : vector<8x8xf32>, vector<8x32xf32>, vector<8x32xf32> -> vector<8x32xf32>
    %65 = vector.extract_strided_slice %7 {offsets = [0, 96], sizes = [8, 32], strides = [1, 1]} : vector<8x128xf32> to vector<8x32xf32>
    %cst_31 = arith.constant 0.176776692 : f32
    %66 = vector.broadcast %cst_31 : f32 to vector<8x32xf32>
    %67 = arith.mulf %65, %66 : vector<8x32xf32>
    %68 = vector.extract_strided_slice %9 {offsets = [0, 96], sizes = [8, 32], strides = [1, 1]} : vector<8x128xf32> to vector<8x32xf32>
    %69 = vector.extract_strided_slice %11 {offsets = [0, 96], sizes = [8, 32], strides = [1, 1]} : vector<8x128xf32> to vector<8x32xf32>
    %cst_32 = arith.constant dense<0.000000e+00> : vector<8x8xf32>
    %70 = tpu.matmul %67, %68, %cst_32 {dimension_numbers = #tpu.dot_dimension_numbers<[1], [1], [0], [0], [0, 0, 1, 0], [], []>} : vector<8x32xf32>, vector<8x32xf32>, vector<8x8xf32> -> vector<8x8xf32>
    %71 = arith.addf %53, %70 : vector<8x8xf32>
    %cst_33 = arith.constant dense<0xFF800000> : vector<8xf32>
    %72 = vector.multi_reduction <maximumf>, %70, %cst_33 [1] : vector<8x8xf32> to vector<8xf32>
    %73 = vector.shape_cast %72 : vector<8xf32> to vector<8x1xf32>
    %74 = vector.broadcast %73 : vector<8x1xf32> to vector<8x8xf32>
    %75 = arith.subf %70, %74 : vector<8x8xf32>
    %76 = math.exp %75 : vector<8x8xf32>
    %cst_34 = arith.constant dense<0.000000e+00> : vector<8xf32>
    %77 = vector.multi_reduction <add>, %76, %cst_34 [1] : vector<8x8xf32> to vector<8xf32>
    %78 = vector.shape_cast %77 : vector<8xf32> to vector<8x1xf32>
    %79 = tpu.reciprocal %78 {approx = true} : vector<8x1xf32> -> vector<8x1xf32>
    %80 = vector.broadcast %79 : vector<8x1xf32> to vector<8x8xf32>
    %81 = arith.mulf %76, %80 : vector<8x8xf32>
    %cst_35 = arith.constant dense<0.000000e+00> : vector<8x32xf32>
    %82 = tpu.matmul %81, %69, %cst_35 {dimension_numbers = #tpu.dot_dimension_numbers<[1], [0], [0], [1], [0, 0, 1, 1], [], []>} : vector<8x8xf32>, vector<8x32xf32>, vector<8x32xf32> -> vector<8x32xf32>
    %83 = tpu.concatenate %28, %46, %64, %82 in 1 : vector<8x32xf32>, vector<8x32xf32>, vector<8x32xf32>, vector<8x32xf32> -> vector<8x128xf32>
    %c0_36 = arith.constant 0 : index
    %c0_37 = arith.constant 0 : index
    %84 = vector.load %arg8[%c0_36, %c0_37] : memref<128x32xf32, #tpu.memory_space<vmem>>, vector<128x32xf32>
    %cst_38 = arith.constant dense<0.000000e+00> : vector<8x32xf32>
    %85 = tpu.matmul %83, %84, %cst_38 {dimension_numbers = #tpu.dot_dimension_numbers<[1], [0], [0], [1], [0, 0, 1, 1], [], []>} : vector<8x128xf32>, vector<128x32xf32>, vector<8x32xf32> -> vector<8x32xf32>
    %c0_39 = arith.constant 0 : index
    %c0_40 = arith.constant 0 : index
    %c0_41 = arith.constant 0 : index
    %86 = vector.load %arg9[%c0_39, %c0_40, %c0_41] : memref<1x8x32xf32, #tpu.memory_space<vmem>>, vector<1x8x32xf32>
    %87 = vector.shape_cast %86 : vector<1x8x32xf32> to vector<8x32xf32>
    %88 = vector.shape_cast %85 : vector<8x32xf32> to vector<1x8x32xf32>
    tpu.vector_store %arg9[%c0_39, %c0_40, %c0_41], %88 {strides = array<i32>} : memref<1x8x32xf32, #tpu.memory_space<vmem>>, vector<1x8x32xf32>,
    %cst_42 = arith.constant 2.500000e-01 : f32
    %89 = vector.broadcast %cst_42 : f32 to vector<8x8xf32>
    %90 = arith.mulf %71, %89 : vector<8x8xf32>
    %c0_43 = arith.constant 0 : index
    %c0_44 = arith.constant 0 : index
    %c0_45 = arith.constant 0 : index
    %91 = vector.load %arg10[%c0_43, %c0_44, %c0_45] : memref<1x8x8xf32, #tpu.memory_space<vmem>>, vector<1x8x8xf32>
    %92 = vector.shape_cast %91 : vector<1x8x8xf32> to vector<8x8xf32>
    %93 = vector.shape_cast %90 : vector<8x8xf32> to vector<1x8x8xf32>
    tpu.vector_store %arg10[%c0_43, %c0_44, %c0_45], %93 {strides = array<i32>} : memref<1x8x8xf32, #tpu.memory_space<vmem>>, vector<1x8x8xf32>,
    return
  }
  func.func @transform_0(%arg0: i32, %arg1: i32) -> (i32, i32, i32) {
    %c0_i32 = arith.constant 0 : i32
    %c0_i32_0 = arith.constant 0 : i32
    return %arg0, %arg1, %c0_i32 : i32, i32, i32
  }
  func.func @transform_1(%arg0: i32, %arg1: i32) -> (i32, i32, i32) {
    %c0_i32 = arith.constant 0 : i32
    %c0_i32_0 = arith.constant 0 : i32
    %c0_i32_1 = arith.constant 0 : i32
    return %arg0, %c0_i32, %c0_i32_0 : i32, i32, i32
  }
  func.func @transform_2(%arg0: i32, %arg1: i32) -> (i32, i32, i32) {
    %c0_i32 = arith.constant 0 : i32
    %c0_i32_0 = arith.constant 0 : i32
    %c0_i32_1 = arith.constant 0 : i32
    return %arg0, %c0_i32, %c0_i32_0 : i32, i32, i32
  }
  func.func @transform_3(%arg0: i32, %arg1: i32) -> (i32, i32) {
    %c0_i32 = arith.constant 0 : i32
    %c0_i32_0 = arith.constant 0 : i32
    %c0_i32_1 = arith.constant 0 : i32
    return %c0_i32, %c0_i32_0 : i32, i32
  }
  func.func @transform_4(%arg0: i32, %arg1: i32) -> (i32, i32) {
    %c0_i32 = arith.constant 0 : i32
    %c0_i32_0 = arith.constant 0 : i32
    %c0_i32_1 = arith.constant 0 : i32
    return %c0_i32, %c0_i32_0 : i32, i32
  }
  func.func @transform_5(%arg0: i32, %arg1: i32) -> (i32, i32) {
    %c0_i32 = arith.constant 0 : i32
    %c0_i32_0 = arith.constant 0 : i32
    %c0_i32_1 = arith.constant 0 : i32
    return %c0_i32, %c0_i32_0 : i32, i32
  }
  func.func @transform_6(%arg0: i32, %arg1: i32) -> (i32, i32) {
    %c0_i32 = arith.constant 0 : i32
    %c0_i32_0 = arith.constant 0 : i32
    %c0_i32_1 = arith.constant 0 : i32
    return %c0_i32, %c0_i32_0 : i32, i32
  }
  func.func @transform_7(%arg0: i32, %arg1: i32) -> (i32, i32, i32) {
    %c0_i32 = arith.constant 0 : i32
    %c0_i32_0 = arith.constant 0 : i32
    return %arg0, %arg1, %c0_i32 : i32, i32, i32
  }
  func.func @transform_8(%arg0: i32, %arg1: i32) -> (i32, i32, i32) {
    %c0_i32 = arith.constant 0 : i32
    %c0_i32_0 = arith.constant 0 : i32
    return %arg0, %arg1, %c0_i32 : i32, i32, i32
  }
}

</mosaic_0001>

<llo_original>
// kernel: tpu_custom_call.1
$region0: #{tpu_custom_call.1}
  #allocation0 [shape = 'u32[]', space=smem, size = 0x4, offset = 0x4, fixed_abs, tag = 'smem constant byte address 0x4 - core index']
  #allocation1 [shape = 'u32[72,128]{1,0:T(1,128)}', space=vmem, size = 0x9000, scoped, tag = 'internal scratch']
  %s0 = inlined_call_operand.vmem [shape: f32[2,8,32], index: 0, kind: input, shape index: {}]
  %s1 = inlined_call_operand.vmem [shape: f32[2,8,32], index: 1, kind: input, shape index: {}]
  %s2 = inlined_call_operand.vmem [shape: f32[2,8,32], index: 2, kind: input, shape index: {}]
  %s3 = inlined_call_operand.vmem [shape: f32[32,128], index: 3, kind: input, shape index: {}]
  %s4 = inlined_call_operand.vmem [shape: f32[32,128], index: 4, kind: input, shape index: {}]
  %s5 = inlined_call_operand.vmem [shape: f32[32,128], index: 5, kind: input, shape index: {}]
  %s6 = inlined_call_operand.vmem [shape: f32[128,32], index: 6, kind: input, shape index: {}]
  %s7 = inlined_call_operand.hbm [shape: f32[2,8,32], index: 7, kind: output, shape index: {0}]
  %s8 = inlined_call_operand.hbm [shape: f32[2,8,8], index: 8, kind: output, shape index: {1}]
  %9 = xla_tuple %s7, %s8
  %s10 = sld [smem:[#allocation0]]
  $region69: #{tpu_custom_call.1} parent=0
    _
  %s12 = ssub.s32 1, %s10
  %s13 = scalar_select 0, %s12, %s10
  $region1: #{tpu_custom_call.1} parent=0
    #allocation2 [shape = 'u8[8192]{0}', space=vmem, size = 0x2000, scoped, tag = 'output window, operand 0']
    #allocation3 [shape = 's32[2]{0}', space=sflag, size = 0x8, scoped, tag = 'scoped memory for tpu_custom_call.1']
    #allocation4 [shape = 'u8[8192]{0}', space=vmem, size = 0x2000, scoped, tag = 'output window, operand 1']
    #allocation5 [shape = 's32[2]{0}', space=sflag, size = 0x8, scoped, tag = 'scoped memory for tpu_custom_call.1']
    %14 = vsyncpa [#allocation3], 0
    %s15 = scalar_lea.sflag [#allocation3], 1
    %16 = vsyncpa %s15, 0
    %17 = vsyncpa [#allocation5], 0
    %s18 = scalar_lea.sflag [#allocation5], 1
    %19 = vsyncpa %s18, 0
    loop: start=0, step=1, limit=4
    $region2: #{tpu_custom_call.1} parent=1 // loop_pre_header
      _
    $region3: #{tpu_custom_call.1} parent=1 // loop_header
      %s21 = sphi 0, %s25
      %p22 = scmp.ge.s32.totalorder %s21, 4
      %s28 = sphi 0, %s40
      %s29 = sphi 0, %s36
      %s30 = sphi 0, %s28
      %s31 = sphi 0, %s29
      %s32 = sphi 0, %s30
      %s33 = sphi 0, %s31
      %s45 = sphi 0, %s47
      %s48 = sphi 0, %s45
      %s49 = sphi 0, %s48
      %s65 = sphi 0, %s49
      %s71 = sphi 0, %s73
      %s74 = sphi 0, %s71
      %s75 = sphi 0, %s74
      %s91 = sphi 0, %s75
      %s97 = sphi 0, %s99
      %s100 = sphi 0, %s97
      %s101 = sphi 0, %s100
      %s117 = sphi 0, %s101
      %s121 = sphi 0, %s121
      %s123 = sphi 0, %s121
      %s124 = sphi 0, %s123
      %s138 = sphi 0, %s124
      %s142 = sphi 0, %s142
      %s144 = sphi 0, %s142
      %s145 = sphi 0, %s144
      %s159 = sphi 0, %s145
      %s163 = sphi 0, %s163
      %s165 = sphi 0, %s163
      %s166 = sphi 0, %s165
      %s180 = sphi 0, %s166
      %s184 = sphi 0, %s184
      %s186 = sphi 0, %s184
      %s187 = sphi 0, %s186
      %s201 = sphi 0, %s187
      %s209 = sphi 0, %s211
      %s212 = sphi 0, %s209
      %s213 = sphi 0, %s212
      %s229 = sphi 0, %s213
      %s237 = sphi 0, %s239
      %s240 = sphi 0, %s237
      %s241 = sphi 0, %s240
      %s257 = sphi 0, %s241
    $region4: #{tpu_custom_call.1} parent=1 // loop_header_branch
      %24 = sbr.rel (%p22) target = $region8
    $region5: #{tpu_custom_call.1} parent=1 // loop_body
      %s26 = ssub.s32 %s21, 1
      %s27 = ssub.s32 %s21, 2
      %s34 = sadd.s32 1, %s29
      %p35 = scmp.ge.s32.totalorder %s34, 1
      %s36 = scalar_select %p35, 0, %s34
      %s37 = sadd.s32 1, %s28
      %s38 = scalar_select %p35, %s37, %s28
      %p39 = scmp.ge.s32.totalorder %s38, 2
      %s40 = scalar_select %p39, 0, %s38
      %s41 = ssub.s32 %s28, %s40
      %s42 = ssub.s32 %s29, %s36
      %s43 = sor.u32 %s41, %s42
      %p44 = scmp.eq.s32.totalorder %s43, 0
      %s46 = sadd.s32 %s45, 1
      %s47 = scalar_select %p44, %s45, %s46
      %p50 = pneg %p44
      %p51 = scmp.eq.s32.totalorder %s21, 1
      %p52 = por %p50, %p51
      %p53 = scmp.ne.s32.totalorder %s45, %s48
      %p54 = scmp.eq.s32.totalorder %s21, 0
      %p55 = por %p53, %p54
      %p56 = scmp.ne.s32.totalorder %s45, %s48
      %p57 = scmp.eq.s32.totalorder %s26, 1
      %p58 = por %p56, %p57
      %p59 = scmp.ne.s32.totalorder %s48, %s49
      %p60 = scmp.eq.s32.totalorder %s26, 0
      %p61 = por %p59, %p60
      %p62 = scmp.ne.s32.totalorder %s48, %s49
      %p63 = scmp.eq.s32.totalorder %s27, 1
      %p64 = por %p62, %p63
      %p66 = scmp.ne.s32.totalorder %s49, %s65
      %p67 = scmp.eq.s32.totalorder %s27, 0
      %p68 = por %p66, %p67
      %s69 = ssub.s32 %s28, %s40
      %p70 = scmp.eq.s32.totalorder %s69, 0
      %s72 = sadd.s32 %s71, 1
      %s73 = scalar_select %p70, %s71, %s72
      %p76 = pneg %p70
      %p77 = scmp.eq.s32.totalorder %s21, 1
      %p78 = por %p76, %p77
      %p79 = scmp.ne.s32.totalorder %s71, %s74
      %p80 = scmp.eq.s32.totalorder %s21, 0
      %p81 = por %p79, %p80
      %p82 = scmp.ne.s32.totalorder %s71, %s74
      %p83 = scmp.eq.s32.totalorder %s26, 1
      %p84 = por %p82, %p83
      %p85 = scmp.ne.s32.totalorder %s74, %s75
      %p86 = scmp.eq.s32.totalorder %s26, 0
      %p87 = por %p85, %p86
      %p88 = scmp.ne.s32.totalorder %s74, %s75
      %p89 = scmp.eq.s32.totalorder %s27, 1
      %p90 = por %p88, %p89
      %p92 = scmp.ne.s32.totalorder %s75, %s91
      %p93 = scmp.eq.s32.totalorder %s27, 0
      %p94 = por %p92, %p93
      %s95 = ssub.s32 %s28, %s40
      %p96 = scmp.eq.s32.totalorder %s95, 0
      %s98 = sadd.s32 %s97, 1
      %s99 = scalar_select %p96, %s97, %s98
      %p102 = pneg %p96
      %p103 = scmp.eq.s32.totalorder %s21, 1
      %p104 = por %p102, %p103
      %p105 = scmp.ne.s32.totalorder %s97, %s100
      %p106 = scmp.eq.s32.totalorder %s21, 0
      %p107 = por %p105, %p106
      %p108 = scmp.ne.s32.totalorder %s97, %s100
      %p109 = scmp.eq.s32.totalorder %s26, 1
      %p110 = por %p108, %p109
      %p111 = scmp.ne.s32.totalorder %s100, %s101
      %p112 = scmp.eq.s32.totalorder %s26, 0
      %p113 = por %p111, %p112
      %p114 = scmp.ne.s32.totalorder %s100, %s101
      %p115 = scmp.eq.s32.totalorder %s27, 1
      %p116 = por %p114, %p115
      %p118 = scmp.ne.s32.totalorder %s101, %s117
      %p119 = scmp.eq.s32.totalorder %s27, 0
      %p120 = por %p118, %p119
      %s122 = sadd.s32 %s121, 1
      %p125 = scmp.eq.s32.totalorder %s21, 1
      %p126 = scmp.ne.s32.totalorder %s121, %s123
      %p127 = scmp.eq.s32.totalorder %s21, 0
      %p128 = por %p126, %p127
      %p129 = scmp.ne.s32.totalorder %s121, %s123
      %p130 = scmp.eq.s32.totalorder %s26, 1
      %p131 = por %p129, %p130
      %p132 = scmp.ne.s32.totalorder %s123, %s124
      %p133 = scmp.eq.s32.totalorder %s26, 0
      %p134 = por %p132, %p133
      %p135 = scmp.ne.s32.totalorder %s123, %s124
      %p136 = scmp.eq.s32.totalorder %s27, 1
      %p137 = por %p135, %p136
      %p139 = scmp.ne.s32.totalorder %s124, %s138
      %p140 = scmp.eq.s32.totalorder %s27, 0
      %p141 = por %p139, %p140
      %s143 = sadd.s32 %s142, 1
      %p146 = scmp.eq.s32.totalorder %s21, 1
      %p147 = scmp.ne.s32.totalorder %s142, %s144
      %p148 = scmp.eq.s32.totalorder %s21, 0
      %p149 = por %p147, %p148
      %p150 = scmp.ne.s32.totalorder %s142, %s144
      %p151 = scmp.eq.s32.totalorder %s26, 1
      %p152 = por %p150, %p151
      %p153 = scmp.ne.s32.totalorder %s144, %s145
      %p154 = scmp.eq.s32.totalorder %s26, 0
      %p155 = por %p153, %p154
      %p156 = scmp.ne.s32.totalorder %s144, %s145
      %p157 = scmp.eq.s32.totalorder %s27, 1
      %p158 = por %p156, %p157
      %p160 = scmp.ne.s32.totalorder %s145, %s159
      %p161 = scmp.eq.s32.totalorder %s27, 0
      %p162 = por %p160, %p161
      %s164 = sadd.s32 %s163, 1
      %p167 = scmp.eq.s32.totalorder %s21, 1
      %p168 = scmp.ne.s32.totalorder %s163, %s165
      %p169 = scmp.eq.s32.totalorder %s21, 0
      %p170 = por %p168, %p169
      %p171 = scmp.ne.s32.totalorder %s163, %s165
      %p172 = scmp.eq.s32.totalorder %s26, 1
      %p173 = por %p171, %p172
      %p174 = scmp.ne.s32.totalorder %s165, %s166
      %p175 = scmp.eq.s32.totalorder %s26, 0
      %p176 = por %p174, %p175
      %p177 = scmp.ne.s32.totalorder %s165, %s166
      %p178 = scmp.eq.s32.totalorder %s27, 1
      %p179 = por %p177, %p178
      %p181 = scmp.ne.s32.totalorder %s166, %s180
      %p182 = scmp.eq.s32.totalorder %s27, 0
      %p183 = por %p181, %p182
      %s185 = sadd.s32 %s184, 1
      %p188 = scmp.eq.s32.totalorder %s21, 1
      %p189 = scmp.ne.s32.totalorder %s184, %s186
      %p190 = scmp.eq.s32.totalorder %s21, 0
      %p191 = por %p189, %p190
      %p192 = scmp.ne.s32.totalorder %s184, %s186
      %p193 = scmp.eq.s32.totalorder %s26, 1
      %p194 = por %p192, %p193
      %p195 = scmp.ne.s32.totalorder %s186, %s187
      %p196 = scmp.eq.s32.totalorder %s26, 0
      %p197 = por %p195, %p196
      %p198 = scmp.ne.s32.totalorder %s186, %s187
      %p199 = scmp.eq.s32.totalorder %s27, 1
      %p200 = por %p198, %p199
      %p202 = scmp.ne.s32.totalorder %s187, %s201
      %p203 = scmp.eq.s32.totalorder %s27, 0
      %p204 = por %p202, %p203
      %s205 = ssub.s32 %s28, %s40
      %s206 = ssub.s32 %s29, %s36
      %s207 = sor.u32 %s205, %s206
      %p208 = scmp.eq.s32.totalorder %s207, 0
      %s210 = sadd.s32 %s209, 1
      %s211 = scalar_select %p208, %s209, %s210
      %p214 = pneg %p208
      %p215 = scmp.eq.s32.totalorder %s21, 1
      %p216 = por %p214, %p215
      %p217 = scmp.ne.s32.totalorder %s209, %s212
      %p218 = scmp.eq.s32.totalorder %s21, 0
      %p219 = por %p217, %p218
      %p220 = scmp.ne.s32.totalorder %s209, %s212
      %p221 = scmp.eq.s32.totalorder %s26, 1
      %p222 = por %p220, %p221
      %p223 = scmp.ne.s32.totalorder %s212, %s213
      %p224 = scmp.eq.s32.totalorder %s26, 0
      %p225 = por %p223, %p224
      %p226 = scmp.ne.s32.totalorder %s212, %s213
      %p227 = scmp.eq.s32.totalorder %s27, 1
      %p228 = por %p226, %p227
      %p230 = scmp.ne.s32.totalorder %s213, %s229
      %p231 = scmp.eq.s32.totalorder %s27, 0
      %p232 = por %p230, %p231
      %s233 = ssub.s32 %s28, %s40
      %s234 = ssub.s32 %s29, %s36
      %s235 = sor.u32 %s233, %s234
      %p236 = scmp.eq.s32.totalorder %s235, 0
      %s238 = sadd.s32 %s237, 1
      %s239 = scalar_select %p236, %s237, %s238
      %p242 = pneg %p236
      %p243 = scmp.eq.s32.totalorder %s21, 1
      %p244 = por %p242, %p243
      %p245 = scmp.ne.s32.totalorder %s237, %s240
      %p246 = scmp.eq.s32.totalorder %s21, 0
      %p247 = por %p245, %p246
      %p248 = scmp.ne.s32.totalorder %s237, %s240
      %p249 = scmp.eq.s32.totalorder %s26, 1
      %p250 = por %p248, %p249
      %p251 = scmp.ne.s32.totalorder %s240, %s241
      %p252 = scmp.eq.s32.totalorder %s26, 0
      %p253 = por %p251, %p252
      %p254 = scmp.ne.s32.totalorder %s240, %s241
      %p255 = scmp.eq.s32.totalorder %s27, 1
      %p256 = por %p254, %p255
      %p258 = scmp.ne.s32.totalorder %s241, %s257
      %p259 = scmp.eq.s32.totalorder %s27, 0
      %p260 = por %p258, %p259
      %p261 = scmp.le.s32.totalorder 1, %s21
      %p262 = scmp.lt.s32.totalorder %s21, 3
      %p263 = pnand %p261, %p262
      %p264 = pneg %p263
      // Predicated region
      $region9: #{tpu_custom_call.1} parent=5 // pred_check
        _
      $region10: #{tpu_custom_call.1} parent=5 // pred_check_branch
        %266 = sbr.rel (%p263) target = $region12
      $region11: #{tpu_custom_call.1} parent=5 // pred_region
        %s267 = ssub.s32 %s21, 1
        // Predicated region
        $region13: #{tpu_custom_call.1} parent=11 // pred_check
          %p268 = pneg %p134
        $region14: #{tpu_custom_call.1} parent=11 // pred_check_branch
          %270 = sbr.rel (%p268) target = $region16
        $region15: #{tpu_custom_call.1} parent=11 // pred_region
          _
        $region16: #{tpu_custom_call.1} parent=11 // pred_fallthru
          _
        // Predicated region
        $region17: #{tpu_custom_call.1} parent=11 // pred_check
          %p271 = pneg %p155
        $region18: #{tpu_custom_call.1} parent=11 // pred_check_branch
          %273 = sbr.rel (%p271) target = $region20
        $region19: #{tpu_custom_call.1} parent=11 // pred_region
          _
        $region20: #{tpu_custom_call.1} parent=11 // pred_fallthru
          _
        // Predicated region
        $region21: #{tpu_custom_call.1} parent=11 // pred_check
          %p274 = pneg %p176
        $region22: #{tpu_custom_call.1} parent=11 // pred_check_branch
          %276 = sbr.rel (%p274) target = $region24
        $region23: #{tpu_custom_call.1} parent=11 // pred_region
          _
        $region24: #{tpu_custom_call.1} parent=11 // pred_fallthru
          _
        // Predicated region
        $region25: #{tpu_custom_call.1} parent=11 // pred_check
          %p277 = pneg %p197
        $region26: #{tpu_custom_call.1} parent=11 // pred_check_branch
          %279 = sbr.rel (%p277) target = $region28
        $region27: #{tpu_custom_call.1} parent=11 // pred_region
          _
        $region28: #{tpu_custom_call.1} parent=11 // pred_fallthru
          _
      $region12: #{tpu_custom_call.1} parent=5 // pred_fallthru
        _
      %p280 = scmp.lt.s32.totalorder %s21, 2
      // Predicated region
      $region29: #{tpu_custom_call.1} parent=5 // pred_check
        %p281 = pneg %p280
      $region30: #{tpu_custom_call.1} parent=5 // pred_check_branch
        %283 = sbr.rel (%p281) target = $region32
      $region31: #{tpu_custom_call.1} parent=5 // pred_region
        // Predicated region
        $region33: #{tpu_custom_call.1} parent=31 // pred_check
          %p284 = pneg %p55
        $region34: #{tpu_custom_call.1} parent=31 // pred_check_branch
          %286 = sbr.rel (%p284) target = $region36
        $region35: #{tpu_custom_call.1} parent=31 // pred_region
          %p287 = scmp.lt.s32.totalorder %s28, 1
          %s288 = scalar_select %p287, %s28, 1
          %p289 = scmp.lt.s32.totalorder %s29, 0
          %s290 = scalar_select %p289, %s29, 0
          %s291 = sadd.s32 %s290, %s288
          %s292 = smul.addr %s291, 8
          %s293 = scalar_lea.vmem %s0, %s292
        $region36: #{tpu_custom_call.1} parent=31 // pred_fallthru
          _
        // Predicated region
        $region37: #{tpu_custom_call.1} parent=31 // pred_check
          %p294 = pneg %p81
        $region38: #{tpu_custom_call.1} parent=31 // pred_check_branch
          %296 = sbr.rel (%p294) target = $region40
        $region39: #{tpu_custom_call.1} parent=31 // pred_region
          %p297 = scmp.lt.s32.totalorder %s28, 1
          %s298 = scalar_select %p297, %s28, 1
          %s299 = smul.addr %s298, 8
          %s300 = scalar_lea.vmem %s1, %s299
        $region40: #{tpu_custom_call.1} parent=31 // pred_fallthru
          _
        // Predicated region
        $region41: #{tpu_custom_call.1} parent=31 // pred_check
          %p301 = pneg %p107
        $region42: #{tpu_custom_call.1} parent=31 // pred_check_branch
          %303 = sbr.rel (%p301) target = $region44
        $region43: #{tpu_custom_call.1} parent=31 // pred_region
          %p304 = scmp.lt.s32.totalorder %s28, 1
          %s305 = scalar_select %p304, %s28, 1
          %s306 = smul.addr %s305, 8
          %s307 = scalar_lea.vmem %s2, %s306
        $region44: #{tpu_custom_call.1} parent=31 // pred_fallthru
          _
      $region32: #{tpu_custom_call.1} parent=5 // pred_fallthru
        _
      %p308 = scmp.le.s32.totalorder 1, %s21
      %p309 = scmp.lt.s32.totalorder %s21, 3
      %p310 = pnand %p308, %p309
      %p311 = pneg %p310
      // Predicated region
      $region45: #{tpu_custom_call.1} parent=5 // pred_check
        _
      $region46: #{tpu_custom_call.1} parent=5 // pred_check_branch
        %313 = sbr.rel (%p310) target = $region48
      $region47: #{tpu_custom_call.1} parent=5 // pred_region
        %s314 = ssub.s32 %s21, 1
        %p315 = scmp.lt.s32.totalorder %s30, 1
        %s316 = scalar_select %p315, %s30, 1
        %p317 = scmp.lt.s32.totalorder %s31, 0
        %s318 = scalar_select %p317, %s31, 0
        %s319 = sadd.s32 %s318, %s316
        %s320 = smul.addr %s319, 8
        %s321 = scalar_lea.vmem %s0, %s320
        %p322 = pneg %p61
        %p323 = pneg %p58
        %p324 = scmp.lt.s32.totalorder %s30, 1
        %s325 = scalar_select %p324, %s30, 1
        %s326 = smul.addr %s325, 8
        %s327 = scalar_lea.vmem %s1, %s326
        %p328 = pneg %p87
        %p329 = pneg %p84
        %p330 = scmp.lt.s32.totalorder %s30, 1
        %s331 = scalar_select %p330, %s30, 1
        %s332 = smul.addr %s331, 8
        %s333 = scalar_lea.vmem %s2, %s332
        %p334 = pneg %p113
        %p335 = pneg %p110
        %p336 = pneg %p134
        %p337 = pneg %p131
        %p338 = pneg %p155
        %p339 = pneg %p152
        %p340 = pneg %p176
        %p341 = pneg %p173
        %p342 = pneg %p197
        %p343 = pneg %p194
        %p344 = pneg %p225
        %p345 = pneg %p222
        %s346 = sand.u32 %s212, 1
        %s347 = scalar_lea.sflag [#allocation3], %s346
        %s348 = sand.u32 %s212, 1
        %s349 = smul.addr %s348, 8
        %s350 = scalar_lea.vmem [#allocation2], %s349
        %p351 = pneg %p253
        %p352 = pneg %p250
        %s353 = sand.u32 %s240, 1
        %s354 = scalar_lea.sflag [#allocation5], %s353
        %s355 = sand.u32 %s240, 1
        %s356 = smul.addr %s355, 8
        %s357 = scalar_lea.vmem [#allocation4], %s356
        %p358 = scmp.lt.s32.totalorder %s30, 1
        %s359 = scalar_select %p358, %s30, 1
        %p360 = scmp.lt.s32.totalorder %s31, 0
        %s361 = scalar_select %p360, %s31, 0
        %s362 = sadd.s32 %s361, %s359
        %s363 = smul.addr %s362, 8
        %s364 = scalar_lea.vmem %s0, %s363
        %p365 = scmp.lt.s32.totalorder %s30, 1
        %s366 = scalar_select %p365, %s30, 1
        %s367 = smul.addr %s366, 8
        %s368 = scalar_lea.vmem %s1, %s367
        %p369 = scmp.lt.s32.totalorder %s30, 1
        %s370 = scalar_select %p369, %s30, 1
        %s371 = smul.addr %s370, 8
        %s372 = scalar_lea.vmem %s2, %s371
        %v373 = vld [vmem:[%s364] sm:$0xff]
        %v374 = vld [vmem:[%s368] sm:$0xff]
        %v375 = vld [vmem:[%s372] sm:$0xff]
        %v376 = vld [vmem:[%s3] sm:$0xff]
        %v377 = vld [vmem:[%s3 + $0x8] sm:$0xff]
        %v378 = vld [vmem:[%s3 + $0x10] sm:$0xff]
        %v379 = vld [vmem:[%s3 + $0x18] sm:$0xff]
        %vm380 = vcmask 261120
        %v382 = vsel %vm380, %v373, 0
        %384 = vmatpush.msra.mxu0 0.0
        %385 = vmatpush.msra.mxu0 0.0
        %386 = vmatpush.msra.mxu0 0.0
        %387 = vmatpush.msra.mxu0 0.0
        %388 = vmatpush.msra.mxu0 0.0
        %389 = vmatpush.msra.mxu0 0.0
        %390 = vmatpush.msra.mxu0 0.0
        %391 = vmatpush.msra.mxu0 0.0
        %392 = vmatpush.msra.mxu0 0.0
        %393 = vmatpush.msra.mxu0 0.0
        %394 = vmatpush.msra.mxu0 0.0
        %395 = vmatpush.msra.mxu0 0.0
        %396 = vmatpush.msra.mxu0 %v379
        %397 = vmatpush.msra.mxu0 %v378
        %398 = vmatpush.msra.mxu0 %v377
        %399 = vmatpush.msra.mxu0 %v376
        %400 = vmatmul.f32.gmra.mxu0 %v382
        %v401 = vpop.f32.mrf.mxu0
        %v402 = vadd.f32 0.0, %v401
        %403 = vdwg.mxu0
        %v404 = vld [vmem:[%s4] sm:$0xff]
        %v405 = vld [vmem:[%s4 + $0x8] sm:$0xff]
        %v406 = vld [vmem:[%s4 + $0x10] sm:$0xff]
        %v407 = vld [vmem:[%s4 + $0x18] sm:$0xff]
        %v409 = vsel %vm380, %v374, 0
        %411 = vmatpush.msra.mxu0 0.0
        %412 = vmatpush.msra.mxu0 0.0
        %413 = vmatpush.msra.mxu0 0.0
        %414 = vmatpush.msra.mxu0 0.0
        %415 = vmatpush.msra.mxu0 0.0
        %416 = vmatpush.msra.mxu0 0.0
        %417 = vmatpush.msra.mxu0 0.0
        %418 = vmatpush.msra.mxu0 0.0
        %419 = vmatpush.msra.mxu0 0.0
        %420 = vmatpush.msra.mxu0 0.0
        %421 = vmatpush.msra.mxu0 0.0
        %422 = vmatpush.msra.mxu0 0.0
        %423 = vmatpush.msra.mxu0 %v407
        %424 = vmatpush.msra.mxu0 %v406
        %425 = vmatpush.msra.mxu0 %v405
        %426 = vmatpush.msra.mxu0 %v404
        %427 = vmatmul.f32.gmra.mxu0 %v409
        %v428 = vpop.f32.mrf.mxu0
        %v429 = vadd.f32 0.0, %v428
        %430 = vdwg.mxu0
        %v431 = vld [vmem:[%s5] sm:$0xff]
        %v432 = vld [vmem:[%s5 + $0x8] sm:$0xff]
        %v433 = vld [vmem:[%s5 + $0x10] sm:$0xff]
        %v434 = vld [vmem:[%s5 + $0x18] sm:$0xff]
        %v436 = vsel %vm380, %v375, 0
        %438 = vmatpush.msra.mxu0 0.0
        %439 = vmatpush.msra.mxu0 0.0
        %440 = vmatpush.msra.mxu0 0.0
        %441 = vmatpush.msra.mxu0 0.0
        %442 = vmatpush.msra.mxu0 0.0
        %443 = vmatpush.msra.mxu0 0.0
        %444 = vmatpush.msra.mxu0 0.0
        %445 = vmatpush.msra.mxu0 0.0
        %446 = vmatpush.msra.mxu0 0.0
        %447 = vmatpush.msra.mxu0 0.0
        %448 = vmatpush.msra.mxu0 0.0
        %449 = vmatpush.msra.mxu0 0.0
        %450 = vmatpush.msra.mxu0 %v434
        %451 = vmatpush.msra.mxu0 %v433
        %452 = vmatpush.msra.mxu0 %v432
        %453 = vmatpush.msra.mxu0 %v431
        %454 = vmatmul.f32.gmra.mxu0 %v436
        %v455 = vpop.f32.mrf.mxu0
        %v456 = vadd.f32 0.0, %v455
        %457 = vdwg.mxu0
        %v458 = vmul.f32 %v402, 0.17677669
        %v460 = vsel %vm380, %v458, 0
        %v463 = vsel %vm380, %v429, 0
        %465 = vmatpush.xpose.msra.mxu0 0.0
        %466 = vmatpush.xpose.msra.mxu0 0.0
        %467 = vmatpush.xpose.msra.mxu0 0.0
        %468 = vmatpush.xpose.msra.mxu0 0.0
        %469 = vmatpush.xpose.msra.mxu0 0.0
        %470 = vmatpush.xpose.msra.mxu0 0.0
        %471 = vmatpush.xpose.msra.mxu0 0.0
        %472 = vmatpush.xpose.msra.mxu0 0.0
        %473 = vmatpush.xpose.msra.mxu0 0.0
        %474 = vmatpush.xpose.msra.mxu0 0.0
        %475 = vmatpush.xpose.msra.mxu0 0.0
        %476 = vmatpush.xpose.msra.mxu0 0.0
        %477 = vmatpush.xpose.msra.mxu0 0.0
        %478 = vmatpush.xpose.msra.mxu0 0.0
        %479 = vmatpush.xpose.msra.mxu0 0.0
        %480 = vmatpush.xpose.msra.mxu0 %v463
        %481 = vmatmul.f32.gmra.mxu0 %v460
        %v482 = vpop.f32.mrf.mxu0
        %v483 = vadd.f32 0.0, %v482
        %484 = vdwg.mxu0
        %vm485 = vcmask 64512
        %v486 = vsel %vm485, %v483, -inf
        %487 = vmax.xlane.f32.xlu0 %v486
        %v488 = vpop.xlane.xlu0 %487
        %v489 = vsub.f32 %v483, %v488
        %v490 = vmul.f32 %v489, 1.442695
        %v491 = vpow.pop %v490
        %v492 = vsel %vm485, %v491, 0.0
        %493 = vadd.xlane.f32.xlu0 %v492
        %v494 = vpop.xlane.xlu0 %493
        %v495 = vrcp.pop %v494
        %v496 = vmul.f32 %v491, %v495
        %v498 = vsel %vm485, %v496, 0
        %500 = vmatpush.msra.mxu0 0.0
        %501 = vmatpush.msra.mxu0 0.0
        %502 = vmatpush.msra.mxu0 0.0
        %503 = vmatpush.msra.mxu0 0.0
        %504 = vmatpush.msra.mxu0 0.0
        %505 = vmatpush.msra.mxu0 0.0
        %506 = vmatpush.msra.mxu0 0.0
        %507 = vmatpush.msra.mxu0 0.0
        %508 = vmatpush.msra.mxu0 0.0
        %509 = vmatpush.msra.mxu0 0.0
        %510 = vmatpush.msra.mxu0 0.0
        %511 = vmatpush.msra.mxu0 0.0
        %512 = vmatpush.msra.mxu0 0.0
        %513 = vmatpush.msra.mxu0 0.0
        %514 = vmatpush.msra.mxu0 0.0
        %515 = vmatpush.msra.mxu0 %v456
        %516 = vmatmul.f32.gmra.mxu0 %v498
        %v517 = vpop.f32.mrf.mxu0
        %v518 = vadd.f32 0.0, %v517
        %519 = vdwg.mxu0
        %520 = vrot.lane.b32.xlu0 %v458, 96
        %v521 = vpop.permute.xlu0 %520
        %522 = vrot.lane.b32.xlu0 %v429, 96
        %v523 = vpop.permute.xlu0 %522
        %v524 = vsel %vm380, %v521, 0
        %v526 = vsel %vm380, %v523, 0
        %528 = vmatpush.xpose.msra.mxu0 0.0
        %529 = vmatpush.xpose.msra.mxu0 0.0
        %530 = vmatpush.xpose.msra.mxu0 0.0
        %531 = vmatpush.xpose.msra.mxu0 0.0
        %532 = vmatpush.xpose.msra.mxu0 0.0
        %533 = vmatpush.xpose.msra.mxu0 0.0
        %534 = vmatpush.xpose.msra.mxu0 0.0
        %535 = vmatpush.xpose.msra.mxu0 0.0
        %536 = vmatpush.xpose.msra.mxu0 0.0
        %537 = vmatpush.xpose.msra.mxu0 0.0
        %538 = vmatpush.xpose.msra.mxu0 0.0
        %539 = vmatpush.xpose.msra.mxu0 0.0
        %540 = vmatpush.xpose.msra.mxu0 0.0
        %541 = vmatpush.xpose.msra.mxu0 0.0
        %542 = vmatpush.xpose.msra.mxu0 0.0
        %543 = vmatpush.xpose.msra.mxu0 %v526
        %544 = vmatmul.f32.gmra.mxu0 %v524
        %v545 = vpop.f32.mrf.mxu0
        %v546 = vadd.f32 0.0, %v545
        %547 = vdwg.mxu0
        %v548 = vadd.f32 %v483, %v546
        %v549 = vsel %vm485, %v546, -inf
        %550 = vmax.xlane.f32.xlu0 %v549
        %v551 = vpop.xlane.xlu0 %550
        %v552 = vsub.f32 %v546, %v551
        %v553 = vmul.f32 %v552, 1.442695
        %v554 = vpow.pop %v553
        %v555 = vsel %vm485, %v554, 0.0
        %556 = vadd.xlane.f32.xlu0 %v555
        %v557 = vpop.xlane.xlu0 %556
        %v558 = vrcp.pop %v557
        %v559 = vmul.f32 %v554, %v558
        %561 = vrot.lane.b32.xlu0 %v456, 96
        %v562 = vpop.permute.xlu0 %561
        %v565 = vsel %vm485, %v559, 0
        %567 = vmatpush.msra.mxu0 0.0
        %568 = vmatpush.msra.mxu0 0.0
        %569 = vmatpush.msra.mxu0 0.0
        %570 = vmatpush.msra.mxu0 0.0
        %571 = vmatpush.msra.mxu0 0.0
        %572 = vmatpush.msra.mxu0 0.0
        %573 = vmatpush.msra.mxu0 0.0
        %574 = vmatpush.msra.mxu0 0.0
        %575 = vmatpush.msra.mxu0 0.0
        %576 = vmatpush.msra.mxu0 0.0
        %577 = vmatpush.msra.mxu0 0.0
        %578 = vmatpush.msra.mxu0 0.0
        %579 = vmatpush.msra.mxu0 0.0
        %580 = vmatpush.msra.mxu0 0.0
        %581 = vmatpush.msra.mxu0 0.0
        %582 = vmatpush.msra.mxu0 %v562
        %583 = vmatmul.f32.gmra.mxu0 %v565
        %v584 = vpop.f32.mrf.mxu0
        %v585 = vadd.f32 0.0, %v584
        %586 = vdwg.mxu0
        %587 = vrot.lane.b32.xlu0 %v458, 64
        %v588 = vpop.permute.xlu0 %587
        %589 = vrot.lane.b32.xlu0 %v429, 64
        %v590 = vpop.permute.xlu0 %589
        %v591 = vsel %vm380, %v588, 0
        %v593 = vsel %vm380, %v590, 0
        %595 = vmatpush.xpose.msra.mxu0 0.0
        %596 = vmatpush.xpose.msra.mxu0 0.0
        %597 = vmatpush.xpose.msra.mxu0 0.0
        %598 = vmatpush.xpose.msra.mxu0 0.0
        %599 = vmatpush.xpose.msra.mxu0 0.0
        %600 = vmatpush.xpose.msra.mxu0 0.0
        %601 = vmatpush.xpose.msra.mxu0 0.0
        %602 = vmatpush.xpose.msra.mxu0 0.0
        %603 = vmatpush.xpose.msra.mxu0 0.0
        %604 = vmatpush.xpose.msra.mxu0 0.0
        %605 = vmatpush.xpose.msra.mxu0 0.0
        %606 = vmatpush.xpose.msra.mxu0 0.0
        %607 = vmatpush.xpose.msra.mxu0 0.0
        %608 = vmatpush.xpose.msra.mxu0 0.0
        %609 = vmatpush.xpose.msra.mxu0 0.0
        %610 = vmatpush.xpose.msra.mxu0 %v593
        %611 = vmatmul.f32.gmra.mxu0 %v591
        %v612 = vpop.f32.mrf.mxu0
        %v613 = vadd.f32 0.0, %v612
        %614 = vdwg.mxu0
        %v615 = vadd.f32 %v548, %v613
        %v616 = vsel %vm485, %v613, -inf
        %617 = vmax.xlane.f32.xlu0 %v616
        %v618 = vpop.xlane.xlu0 %617
        %v619 = vsub.f32 %v613, %v618
        %v620 = vmul.f32 %v619, 1.442695
        %v621 = vpow.pop %v620
        %v622 = vsel %vm485, %v621, 0.0
        %623 = vadd.xlane.f32.xlu0 %v622
        %v624 = vpop.xlane.xlu0 %623
        %v625 = vrcp.pop %v624
        %v626 = vmul.f32 %v621, %v625
        %627 = vrot.lane.b32.xlu0 %v456, 64
        %v628 = vpop.permute.xlu0 %627
        %v631 = vsel %vm485, %v626, 0
        %633 = vmatpush.msra.mxu0 0.0
        %634 = vmatpush.msra.mxu0 0.0
        %635 = vmatpush.msra.mxu0 0.0
        %636 = vmatpush.msra.mxu0 0.0
        %637 = vmatpush.msra.mxu0 0.0
        %638 = vmatpush.msra.mxu0 0.0
        %639 = vmatpush.msra.mxu0 0.0
        %640 = vmatpush.msra.mxu0 0.0
        %641 = vmatpush.msra.mxu0 0.0
        %642 = vmatpush.msra.mxu0 0.0
        %643 = vmatpush.msra.mxu0 0.0
        %644 = vmatpush.msra.mxu0 0.0
        %645 = vmatpush.msra.mxu0 0.0
        %646 = vmatpush.msra.mxu0 0.0
        %647 = vmatpush.msra.mxu0 0.0
        %648 = vmatpush.msra.mxu0 %v628
        %649 = vmatmul.f32.gmra.mxu0 %v631
        %v650 = vpop.f32.mrf.mxu0
        %v651 = vadd.f32 0.0, %v650
        %652 = vdwg.mxu0
        %653 = vrot.lane.b32.xlu0 %v458, 32
        %v654 = vpop.permute.xlu0 %653
        %655 = vrot.lane.b32.xlu0 %v429, 32
        %v656 = vpop.permute.xlu0 %655
        %v657 = vsel %vm380, %v654, 0
        %v659 = vsel %vm380, %v656, 0
        %661 = vmatpush.xpose.msra.mxu0 0.0
        %662 = vmatpush.xpose.msra.mxu0 0.0
        %663 = vmatpush.xpose.msra.mxu0 0.0
        %664 = vmatpush.xpose.msra.mxu0 0.0
        %665 = vmatpush.xpose.msra.mxu0 0.0
        %666 = vmatpush.xpose.msra.mxu0 0.0
        %667 = vmatpush.xpose.msra.mxu0 0.0
        %668 = vmatpush.xpose.msra.mxu0 0.0
        %669 = vmatpush.xpose.msra.mxu0 0.0
        %670 = vmatpush.xpose.msra.mxu0 0.0
        %671 = vmatpush.xpose.msra.mxu0 0.0
        %672 = vmatpush.xpose.msra.mxu0 0.0
        %673 = vmatpush.xpose.msra.mxu0 0.0
        %674 = vmatpush.xpose.msra.mxu0 0.0
        %675 = vmatpush.xpose.msra.mxu0 0.0
        %676 = vmatpush.xpose.msra.mxu0 %v659
        %677 = vmatmul.f32.gmra.mxu0 %v657
        %v678 = vpop.f32.mrf.mxu0
        %v679 = vadd.f32 0.0, %v678
        %680 = vdwg.mxu0
        %v681 = vadd.f32 %v615, %v679
        %v682 = vsel %vm485, %v679, -inf
        %683 = vmax.xlane.f32.xlu0 %v682
        %v684 = vpop.xlane.xlu0 %683
        %v685 = vsub.f32 %v679, %v684
        %v686 = vmul.f32 %v685, 1.442695
        %v687 = vpow.pop %v686
        %v688 = vsel %vm485, %v687, 0.0
        %689 = vadd.xlane.f32.xlu0 %v688
        %v690 = vpop.xlane.xlu0 %689
        %v691 = vrcp.pop %v690
        %v692 = vmul.f32 %v687, %v691
        %693 = vrot.lane.b32.xlu0 %v456, 32
        %v694 = vpop.permute.xlu0 %693
        %v697 = vsel %vm485, %v692, 0
        %699 = vmatpush.msra.mxu0 0.0
        %700 = vmatpush.msra.mxu0 0.0
        %701 = vmatpush.msra.mxu0 0.0
        %702 = vmatpush.msra.mxu0 0.0
        %703 = vmatpush.msra.mxu0 0.0
        %704 = vmatpush.msra.mxu0 0.0
        %705 = vmatpush.msra.mxu0 0.0
        %706 = vmatpush.msra.mxu0 0.0
        %707 = vmatpush.msra.mxu0 0.0
        %708 = vmatpush.msra.mxu0 0.0
        %709 = vmatpush.msra.mxu0 0.0
        %710 = vmatpush.msra.mxu0 0.0
        %711 = vmatpush.msra.mxu0 0.0
        %712 = vmatpush.msra.mxu0 0.0
        %713 = vmatpush.msra.mxu0 0.0
        %714 = vmatpush.msra.mxu0 %v694
        %715 = vmatmul.f32.gmra.mxu0 %v697
        %v716 = vpop.f32.mrf.mxu0
        %v717 = vadd.f32 0.0, %v716
        %718 = vdwg.mxu0
        %720 = vrot.lane.b32.xlu0 %v585, 32
        %v721 = vpop.permute.xlu0 %720
        %724 = vrot.lane.b32.xlu0 %v651, 64
        %v725 = vpop.permute.xlu0 %724
        %728 = vrot.lane.b32.xlu0 %v717, 96
        %v729 = vpop.permute.xlu0 %728
        %v731 = vsel %vm380, %v518, %v721
        %vm732 = vcmask 523264
        %v733 = vsel %vm732, %v731, %v725
        %vm734 = vcmask 785408
        %v735 = vsel %vm734, %v733, %v729
        %v736 = vld [vmem:[%s6] sm:$0xff]
        %v737 = vld [vmem:[%s6 + $0x8] sm:$0xff]
        %v738 = vld [vmem:[%s6 + $0x10] sm:$0xff]
        %v739 = vld [vmem:[%s6 + $0x18] sm:$0xff]
        %v740 = vld [vmem:[%s6 + $0x20] sm:$0xff]
        %v741 = vld [vmem:[%s6 + $0x28] sm:$0xff]
        %v742 = vld [vmem:[%s6 + $0x30] sm:$0xff]
        %v743 = vld [vmem:[%s6 + $0x38] sm:$0xff]
        %v744 = vld [vmem:[%s6 + $0x40] sm:$0xff]
        %v745 = vld [vmem:[%s6 + $0x48] sm:$0xff]
        %v746 = vld [vmem:[%s6 + $0x50] sm:$0xff]
        %v747 = vld [vmem:[%s6 + $0x58] sm:$0xff]
        %v748 = vld [vmem:[%s6 + $0x60] sm:$0xff]
        %v749 = vld [vmem:[%s6 + $0x68] sm:$0xff]
        %v750 = vld [vmem:[%s6 + $0x70] sm:$0xff]
        %v751 = vld [vmem:[%s6 + $0x78] sm:$0xff]
        %752 = vmatpush.msra.mxu0 %v751
        %753 = vmatpush.msra.mxu0 %v750
        %754 = vmatpush.msra.mxu0 %v749
        %755 = vmatpush.msra.mxu0 %v748
        %756 = vmatpush.msra.mxu0 %v747
        %757 = vmatpush.msra.mxu0 %v746
        %758 = vmatpush.msra.mxu0 %v745
        %759 = vmatpush.msra.mxu0 %v744
        %760 = vmatpush.msra.mxu0 %v743
        %761 = vmatpush.msra.mxu0 %v742
        %762 = vmatpush.msra.mxu0 %v741
        %763 = vmatpush.msra.mxu0 %v740
        %764 = vmatpush.msra.mxu0 %v739
        %765 = vmatpush.msra.mxu0 %v738
        %766 = vmatpush.msra.mxu0 %v737
        %767 = vmatpush.msra.mxu0 %v736
        %768 = vmatmul.f32.gmra.mxu0 %v735
        %v769 = vpop.f32.mrf.mxu0
        %v770 = vadd.f32 0.0, %v769
        %771 = vdwg.mxu0
        %772 = vst.msk [vmem:[%s350] sm:$0xff] %vm380, %v770
        %v773 = vmul.f32 %v681, 0.25
        %774 = vst.msk [vmem:[%s357] sm:$0xff] %vm485, %v773
        %s775 = sand.u32 %s212, 1
        %s776 = scalar_lea.sflag [#allocation3], %s775
        %s777 = sand.u32 %s212, 1
        %s778 = smul.addr %s777, 8
        %s779 = scalar_lea.vmem [#allocation2], %s778
        %s780 = sand.u32 %s240, 1
        %s781 = scalar_lea.sflag [#allocation5], %s780
        %s782 = sand.u32 %s240, 1
        %s783 = smul.addr %s782, 8
        %s784 = scalar_lea.vmem [#allocation4], %s783
        // Predicated region
        $region49: #{tpu_custom_call.1} parent=47 // pred_check
          %p785 = pneg %p222
        $region50: #{tpu_custom_call.1} parent=47 // pred_check_branch
          %787 = sbr.rel (%p785) target = $region52
        $region51: #{tpu_custom_call.1} parent=47 // pred_region
          %789 = vsyncadd %s776, 0
          %s790 = sadd.s32 %s31, %s30
          %s791 = smul.addr %s790, 8
          %s792 = scalar_lea.hbm %s7, %s791
          %s794 = sshll.u32 %s779, 4
          %s795 = int_to_ptr.vmem [resolvable:$true] %s794
          %s796 = sshll.u32 %s792, 4
          %s797 = int_to_ptr.hbm [resolvable:$true] %s796
          %799 = dma.vmem_to_hbm [thread:$0]  %s795, 128, %s797, %s776
        $region52: #{tpu_custom_call.1} parent=47 // pred_fallthru
          _
        // Predicated region
        $region53: #{tpu_custom_call.1} parent=47 // pred_check
          %p800 = pneg %p250
        $region54: #{tpu_custom_call.1} parent=47 // pred_check_branch
          %802 = sbr.rel (%p800) target = $region56
        $region55: #{tpu_custom_call.1} parent=47 // pred_region
          %804 = vsyncadd %s781, 0
          %s805 = sadd.s32 %s31, %s30
          %s806 = smul.addr %s805, 8
          %s807 = scalar_lea.hbm %s8, %s806
          %s809 = sshll.u32 %s784, 4
          %s810 = int_to_ptr.vmem [resolvable:$true] %s809
          %s811 = sshll.u32 %s807, 4
          %s812 = int_to_ptr.hbm [resolvable:$true] %s811
          %814 = dma.vmem_to_hbm [thread:$0]  %s810, 128, %s812, %s781
        $region56: #{tpu_custom_call.1} parent=47 // pred_fallthru
          _
      $region48: #{tpu_custom_call.1} parent=5 // pred_fallthru
        _
      %p815 = scmp.le.s32.totalorder 2, %s21
      // Predicated region
      $region57: #{tpu_custom_call.1} parent=5 // pred_check
        %p816 = pneg %p815
      $region58: #{tpu_custom_call.1} parent=5 // pred_check_branch
        %818 = sbr.rel (%p816) target = $region60
      $region59: #{tpu_custom_call.1} parent=5 // pred_region
        %s819 = ssub.s32 %s21, 2
        // Predicated region
        $region61: #{tpu_custom_call.1} parent=59 // pred_check
          %p820 = pneg %p228
        $region62: #{tpu_custom_call.1} parent=59 // pred_check_branch
          %822 = sbr.rel (%p820) target = $region64
        $region63: #{tpu_custom_call.1} parent=59 // pred_region
          %s823 = sand.u32 %s213, 1
          %s824 = scalar_lea.sflag [#allocation3], %s823
          %s825 = sand.u32 %s213, 1
          %s826 = smul.addr %s825, 8
          %s827 = scalar_lea.vmem [#allocation2], %s826
          %829 = dma.done %s824, 128
        $region64: #{tpu_custom_call.1} parent=59 // pred_fallthru
          _
        // Predicated region
        $region65: #{tpu_custom_call.1} parent=59 // pred_check
          %p830 = pneg %p256
        $region66: #{tpu_custom_call.1} parent=59 // pred_check_branch
          %832 = sbr.rel (%p830) target = $region68
        $region67: #{tpu_custom_call.1} parent=59 // pred_region
          %s833 = sand.u32 %s241, 1
          %s834 = scalar_lea.sflag [#allocation5], %s833
          %s835 = sand.u32 %s241, 1
          %s836 = smul.addr %s835, 8
          %s837 = scalar_lea.vmem [#allocation4], %s836
          %839 = dma.done %s834, 128
        $region68: #{tpu_custom_call.1} parent=59 // pred_fallthru
          _
      $region60: #{tpu_custom_call.1} parent=5 // pred_fallthru
        _
    $region6: #{tpu_custom_call.1} parent=1 // loop_footer
      %s25 = sadd.s32 1, %s21
    $region7: #{tpu_custom_call.1} parent=1 // loop_footer_branch
      %20 = sbr.rel target = $region3
    $region8: #{tpu_custom_call.1} parent=1 // loop_exit
      _
    %840 = vsyncpa [#allocation3], 1
    %s841 = scalar_lea.sflag [#allocation3], 1
    %842 = vsyncpa %s841, 1
    %843 = vsyncpa [#allocation5], 1
    %s844 = scalar_lea.sflag [#allocation5], 1
    %845 = vsyncpa %s844, 1

</llo_original>
